<compile_context>
chip_gen: v7x
topology: tpu7x:2x2x1
jax: 0.10.0
libtpu: 0.0.40
codegen_flags: <defaults>
</compile_context>

<pallas_src>
import jax
import jax.numpy as jnp
from jax.experimental import pallas as pl
from jax.experimental.pallas import tpu as pltpu


def _lstm_cell_kernel(xh_ref, c_ref, w_ref, b_ref, h_new_ref, c_new_ref):
    H = c_ref.shape[-1]

    # Single fused MXU matmul: (B, I+H) bf16 @ (I+H, 4H) bf16, f32 accumulate.
    g = jnp.dot(xh_ref[...], w_ref[...],
                preferred_element_type=jnp.float32) + b_ref[...]

    # Gate order matches PyTorch chunk(4, 1): [input, forget, candidate, output].
    input_gate = jax.nn.sigmoid(g[:, 0 * H:1 * H])
    forget_gate = jax.nn.sigmoid(g[:, 1 * H:2 * H])
    candidate = jnp.tanh(g[:, 2 * H:3 * H])
    output_gate = jax.nn.sigmoid(g[:, 3 * H:4 * H])

    c_prev = c_ref[...].astype(jnp.float32)
    c_new = c_prev * forget_gate + input_gate * candidate
    h_new = jnp.tanh(c_new) * output_gate

    h_new_ref[...] = h_new.astype(h_new_ref.dtype)
    c_new_ref[...] = c_new.astype(c_new_ref.dtype)


def prepare_lstm_params(W_ih, W_hh, b_ih, b_hh, weight_dtype=jnp.bfloat16):
    """One-time parameter glue (do NOT call per time step).

    W_ih: (4H, I), W_hh: (4H, H)  ->  W_cat_T: (I+H, 4H) in `weight_dtype`
    b_ih, b_hh: (4H,)             ->  b: (1, 4H) f32, pre-summed
    """
    four_h = W_ih.shape[0]
    W_cat_T = jnp.concatenate([W_ih, W_hh], axis=1).T.astype(weight_dtype)
    b = (b_ih.astype(jnp.float32) + b_hh.astype(jnp.float32)).reshape(1, four_h)
    return W_cat_T, b


def lstm_cell(x, W_cat_T, b, hidden=None):
    """Pallas LSTM cell step. x:(B,I); W_cat_T:(I+H,4H); b:(1,4H)."""
    B, I = x.shape
    four_h = W_cat_T.shape[-1]
    H = four_h // 4
    assert W_cat_T.shape[0] == I + H and b.shape == (1, four_h)

    if hidden is not None:
        h_prev, c_prev = hidden
    else:
        h_prev = jnp.zeros((B, H), dtype=x.dtype)
        c_prev = jnp.zeros((B, H), dtype=x.dtype)

    # Tiny per-step glue: fused activation block, cast to the MXU input dtype.
    xh = jnp.concatenate([x, h_prev], axis=-1).astype(W_cat_T.dtype)
    c_prev = c_prev.astype(jnp.float32)

    vmem = pl.BlockSpec(memory_space=pltpu.MemorySpace.VMEM)
    h_new, c_new = pl.pallas_call(
        _lstm_cell_kernel,
        out_shape=(
            jax.ShapeDtypeStruct((B, H), x.dtype),      # h_new
            jax.ShapeDtypeStruct((B, H), jnp.float32),  # c_new (f32 state)
        ),
        in_specs=[vmem, vmem, vmem, vmem],
        out_specs=(vmem, vmem),
        input_output_aliases={1: 1},  # c_prev buffer reused for c_new
        compiler_params=pltpu.CompilerParams(
            vmem_limit_bytes=48 * 1024 * 1024),
    )(xh, c_prev, W_cat_T, b)
    return [h_new, c_new]


def _reference(x, h_prev, c_prev, W_ih, W_hh, b_ih, b_hh,
               weight_dtype=jnp.bfloat16):
    """Pure-JAX reference using the same bf16-rounded operands as the kernel."""
    f32 = jnp.float32
    xh = jnp.concatenate([x, h_prev], axis=-1).astype(weight_dtype).astype(f32)
    W = jnp.concatenate([W_ih, W_hh], axis=1).astype(weight_dtype).astype(f32)
    g = xh @ W.T + (b_ih + b_hh).astype(f32)
    H = h_prev.shape[-1]
    i = jax.nn.sigmoid(g[:, 0 * H:1 * H])
    f = jax.nn.sigmoid(g[:, 1 * H:2 * H])
    c = jnp.tanh(g[:, 2 * H:3 * H])
    o = jax.nn.sigmoid(g[:, 3 * H:4 * H])
    c_new = c_prev.astype(f32) * f + i * c
    h_new = jnp.tanh(c_new) * o
    return h_new, c_new


if __name__ == "__main__":
    B, I, H = 8, 64, 128  # small, lane-aligned shapes (4H = 512)

    key = jax.random.PRNGKey(0)
    k_x, k_h, k_c, k_wih, k_whh = jax.random.split(key, 5)

    x = jax.random.normal(k_x, (B, I), dtype=jnp.float32)
    h_prev = jax.random.normal(k_h, (B, H), dtype=jnp.float32)
    c_prev = jax.random.normal(k_c, (B, H), dtype=jnp.float32)

    # Deterministic parameter init mirroring torch.randn / torch.zeros shapes.
    W_ih = jax.random.normal(k_wih, (4 * H, I), dtype=jnp.float32)
    W_hh = jax.random.normal(k_whh, (4 * H, H), dtype=jnp.float32)
    b_ih = jnp.zeros((4 * H,), dtype=jnp.float32)
    b_hh = jnp.zeros((4 * H,), dtype=jnp.float32)

    # One-time parameter prep (stack/transpose/cast happens here, not per step).
    W_cat_T, b = prepare_lstm_params(W_ih, W_hh, b_ih, b_hh)

    # Compute the reference BEFORE the kernel call: c_prev's buffer is donated
    # to c_new via input_output_aliases and must not be read afterwards.
    h_ref, c_ref = _reference(x, h_prev, c_prev, W_ih, W_hh, b_ih, b_hh)
    jax.block_until_ready((h_ref, c_ref))

    h_new, c_new = lstm_cell(x, W_cat_T, b, hidden=[h_prev, c_prev])
    jax.block_until_ready((h_new, c_new))

    assert jnp.allclose(h_new, h_ref, atol=1e-3, rtol=1e-3), \
        float(jnp.max(jnp.abs(h_new - h_ref)))
    assert jnp.allclose(c_new, c_ref, atol=1e-3, rtol=1e-3), \
        float(jnp.max(jnp.abs(c_new - c_ref)))

    print("KERNEL_OK")
</pallas_src>

<mosaic_0001>
module attributes {stable_mosaic.version = 11 : i64} {
  func.func @_lstm_cell_kernel(%arg0: memref<8x192xbf16, #tpu.memory_space<vmem>>, %arg1: memref<8x128xf32, #tpu.memory_space<vmem>>, %arg2: memref<192x512xbf16, #tpu.memory_space<vmem>>, %arg3: memref<1x512xf32, #tpu.memory_space<vmem>>, %arg4: memref<8x128xf32, #tpu.memory_space<vmem>>, %arg5: memref<8x128xf32, #tpu.memory_space<vmem>>) attributes {dimension_semantics = [], scalar_prefetch = 0 : i64, scratch_operands = 0 : i64, tpu.core_type = #tpu.core_type<tc>} {
    %c0 = arith.constant 0 : index
    %c0_0 = arith.constant 0 : index
    %0 = vector.load %arg0[%c0, %c0_0] : memref<8x192xbf16, #tpu.memory_space<vmem>>, vector<8x192xbf16>
    %c0_1 = arith.constant 0 : index
    %c0_2 = arith.constant 0 : index
    %1 = vector.load %arg2[%c0_1, %c0_2] : memref<192x512xbf16, #tpu.memory_space<vmem>>, vector<192x512xbf16>
    %cst = arith.constant dense<0.000000e+00> : vector<8x512xf32>
    %2 = tpu.matmul %0, %1, %cst {dimension_numbers = #tpu.dot_dimension_numbers<[1], [0], [0], [1], [0, 0, 1, 1], [], []>} : vector<8x192xbf16>, vector<192x512xbf16>, vector<8x512xf32> -> vector<8x512xf32>
    %c0_3 = arith.constant 0 : index
    %c0_4 = arith.constant 0 : index
    %3 = vector.load %arg3[%c0_3, %c0_4] : memref<1x512xf32, #tpu.memory_space<vmem>>, vector<1x512xf32>
    %4 = vector.broadcast %3 : vector<1x512xf32> to vector<8x512xf32>
    %5 = arith.addf %2, %4 : vector<8x512xf32>
    %6 = vector.extract_strided_slice %5 {offsets = [0, 0], sizes = [8, 128], strides = [1, 1]} : vector<8x512xf32> to vector<8x128xf32>
    %7 = arith.negf %6 : vector<8x128xf32>
    %8 = math.exp %7 : vector<8x128xf32>
    %cst_5 = arith.constant 1.000000e+00 : f32
    %9 = vector.broadcast %cst_5 : f32 to vector<8x128xf32>
    %10 = arith.addf %9, %8 : vector<8x128xf32>
    %11 = arith.divf %9, %10 : vector<8x128xf32>
    %12 = vector.extract_strided_slice %5 {offsets = [0, 128], sizes = [8, 128], strides = [1, 1]} : vector<8x512xf32> to vector<8x128xf32>
    %13 = arith.negf %12 : vector<8x128xf32>
    %14 = math.exp %13 : vector<8x128xf32>
    %cst_6 = arith.constant 1.000000e+00 : f32
    %15 = vector.broadcast %cst_6 : f32 to vector<8x128xf32>
    %16 = arith.addf %15, %14 : vector<8x128xf32>
    %17 = arith.divf %15, %16 : vector<8x128xf32>
    %18 = vector.extract_strided_slice %5 {offsets = [0, 256], sizes = [8, 128], strides = [1, 1]} : vector<8x512xf32> to vector<8x128xf32>
    %19 = math.tanh %18 : vector<8x128xf32>
    %20 = vector.extract_strided_slice %5 {offsets = [0, 384], sizes = [8, 128], strides = [1, 1]} : vector<8x512xf32> to vector<8x128xf32>
    %21 = arith.negf %20 : vector<8x128xf32>
    %22 = math.exp %21 : vector<8x128xf32>
    %cst_7 = arith.constant 1.000000e+00 : f32
    %23 = vector.broadcast %cst_7 : f32 to vector<8x128xf32>
    %24 = arith.addf %23, %22 : vector<8x128xf32>
    %25 = arith.divf %23, %24 : vector<8x128xf32>
    %c0_8 = arith.constant 0 : index
    %c0_9 = arith.constant 0 : index
    %26 = vector.load %arg1[%c0_8, %c0_9] : memref<8x128xf32, #tpu.memory_space<vmem>>, vector<8x128xf32>
    %27 = arith.mulf %26, %17 : vector<8x128xf32>
    %28 = arith.mulf %11, %19 : vector<8x128xf32>
    %29 = arith.addf %27, %28 : vector<8x128xf32>
    %30 = math.tanh %29 : vector<8x128xf32>
    %31 = arith.mulf %30, %25 : vector<8x128xf32>
    %c0_10 = arith.constant 0 : index
    %c0_11 = arith.constant 0 : index
    %32 = vector.load %arg4[%c0_10, %c0_11] : memref<8x128xf32, #tpu.memory_space<vmem>>, vector<8x128xf32>
    tpu.vector_store %arg4[%c0_10, %c0_11], %31 {strides = array<i32>} : memref<8x128xf32, #tpu.memory_space<vmem>>, vector<8x128xf32>,
    %c0_12 = arith.constant 0 : index
    %c0_13 = arith.constant 0 : index
    %33 = vector.load %arg5[%c0_12, %c0_13] : memref<8x128xf32, #tpu.memory_space<vmem>>, vector<8x128xf32>
    tpu.vector_store %arg5[%c0_12, %c0_13], %29 {strides = array<i32>} : memref<8x128xf32, #tpu.memory_space<vmem>>, vector<8x128xf32>,
    return
  }
}

</mosaic_0001>

<llo_original>
// kernel: tpu_custom_call.1
$region0: #{tpu_custom_call.1}
  #allocation0 [shape = 'u32[]', space=smem, size = 0x4, offset = 0x4, fixed_abs, tag = 'smem constant byte address 0x4 - core index']
  #allocation1 [shape = 'u32[144,128]{1,0:T(1,128)}', space=vmem, size = 0x12000, scoped, tag = 'internal scratch']
  %s0 = inlined_call_operand.vmem [shape: bf16[8,192], index: 0, kind: input, shape index: {}]
  %s1 = inlined_call_operand.hbm [shape: f32[8,128], index: 1, kind: input, shape index: {}, may-alias: {1,5}]
  %s2 = inlined_call_operand.hbm [shape: bf16[192,512], index: 2, kind: input, shape index: {}]
  %s3 = inlined_call_operand.vmem [shape: f32[1,512], index: 3, kind: input, shape index: {}]
  %s4 = inlined_call_operand.hbm [shape: f32[8,128], index: 4, kind: output, shape index: {0}]
  %s5 = inlined_call_operand.hbm [shape: f32[8,128], index: 5, kind: output, shape index: {1}, may-alias: {1,5}]
  %6 = xla_tuple %s4, %s5
  %s7 = sld [smem:[#allocation0]]
  $region42: #{tpu_custom_call.1} parent=0
    _
  %s9 = ssub.s32 1, %s7
  %s10 = scalar_select 0, %s9, %s7
  $region1: #{tpu_custom_call.1} parent=0
    #allocation2 [shape = 'u8[4096]{0}', space=vmem, size = 0x1000, scoped, tag = 'input window, operand 1, single buffered']
    #allocation3 [shape = 's32[1]{0}', space=sflag, size = 0x4, scoped, tag = 'scoped memory for tpu_custom_call.1']
    #allocation4 [shape = 's32[1]{0}', space=sflag, size = 0x4, scoped, tag = 'scoped memory for tpu_custom_call.1']
    #allocation5 [shape = 'u8[196608]{0}', space=vmem, size = 0x30000, scoped, tag = 'input window, operand 2, single buffered']
    #allocation6 [shape = 's32[1]{0}', space=sflag, size = 0x4, scoped, tag = 'scoped memory for tpu_custom_call.1']
    #allocation7 [shape = 'u8[4096]{0}', space=vmem, size = 0x1000, scoped, tag = 'output window, operand 0, single buffered']
    #allocation8 [shape = 'u8[4096]{0}', space=vmem, size = 0x1000, scoped, tag = 'output window, operand 1, single buffered']
    #allocation9 [shape = 's32[1]{0}', space=sflag, size = 0x4, scoped, tag = 'scoped memory for tpu_custom_call.1']
    %11 = vsyncpa [#allocation3], 0
    %12 = vsyncpa [#allocation6], 0
    %13 = vsyncpa [#allocation4], 0
    %14 = vsyncpa [#allocation9], 0
    // Predicated region
    $region2: #{tpu_custom_call.1} parent=1 // pred_check
      _
    $region3: #{tpu_custom_call.1} parent=1 // pred_check_branch
      %16 = sbr.rel (0) target = $region5
    $region4: #{tpu_custom_call.1} parent=1 // pred_region
      _
    $region5: #{tpu_custom_call.1} parent=1 // pred_fallthru
      _
    // Predicated region
    $region6: #{tpu_custom_call.1} parent=1 // pred_check
      _
    $region7: #{tpu_custom_call.1} parent=1 // pred_check_branch
      %18 = sbr.rel (0) target = $region9
    $region8: #{tpu_custom_call.1} parent=1 // pred_region
      %s20 = ssub.s32 128, 128
      %21 = vsyncadd [#allocation3], %s20
      %s23 = sshll.u32 [#allocation2], 4
      %s24 = int_to_ptr.vmem [resolvable:$true] %s23
      %26 = dma.hbm_to_vmem [thread:$0]  %s1, 128, %s24, [#allocation3]
    $region9: #{tpu_custom_call.1} parent=1 // pred_fallthru
      _
    // Predicated region
    $region10: #{tpu_custom_call.1} parent=1 // pred_check
      _
    $region11: #{tpu_custom_call.1} parent=1 // pred_check_branch
      %28 = sbr.rel (0) target = $region13
    $region12: #{tpu_custom_call.1} parent=1 // pred_region
      %s30 = ssub.s32 6144, 6144
      %31 = vsyncadd [#allocation6], %s30
      %s32 = sshll.u32 [#allocation5], 4
      %s33 = int_to_ptr.vmem [resolvable:$true] %s32
      %38 = dma.hbm_to_vmem [thread:$0]  %s2, 6144, %s33, [#allocation6], 256, 256, 16
    $region13: #{tpu_custom_call.1} parent=1 // pred_fallthru
      _
    // Predicated region
    $region14: #{tpu_custom_call.1} parent=1 // pred_check
      _
    $region15: #{tpu_custom_call.1} parent=1 // pred_check_branch
      %40 = sbr.rel (0) target = $region17
    $region16: #{tpu_custom_call.1} parent=1 // pred_region
      _
    $region17: #{tpu_custom_call.1} parent=1 // pred_fallthru
      _
    // Predicated region
    $region18: #{tpu_custom_call.1} parent=1 // pred_check
      _
    $region19: #{tpu_custom_call.1} parent=1 // pred_check_branch
      %42 = sbr.rel (0) target = $region21
    $region20: #{tpu_custom_call.1} parent=1 // pred_region
      %43 = dma.done [#allocation3], 128
    $region21: #{tpu_custom_call.1} parent=1 // pred_fallthru
      _
    // Predicated region
    $region22: #{tpu_custom_call.1} parent=1 // pred_check
      _
    $region23: #{tpu_custom_call.1} parent=1 // pred_check_branch
      %45 = sbr.rel (0) target = $region25
    $region24: #{tpu_custom_call.1} parent=1 // pred_region
      %46 = dma.done [#allocation6], 6144
    $region25: #{tpu_custom_call.1} parent=1 // pred_fallthru
      _
    %v48 = vld [vmem:[%s0] sm:$0xff]
    %v49 = vld [vmem:[#allocation5] sm:$0xff]
    %v50 = vld [vmem:[#allocation5 + $0x8] sm:$0xff]
    %v51 = vld [vmem:[#allocation5 + $0x10] sm:$0xff]
    %v52 = vld [vmem:[#allocation5 + $0x18] sm:$0xff]
    %v53 = vld [vmem:[#allocation5 + $0x20] sm:$0xff]
    %v54 = vld [vmem:[#allocation5 + $0x28] sm:$0xff]
    %v55 = vld [vmem:[#allocation5 + $0x30] sm:$0xff]
    %v56 = vld [vmem:[#allocation5 + $0x38] sm:$0xff]
    %v57 = vld [vmem:[#allocation5 + $0x40] sm:$0xff]
    %v58 = vld [vmem:[#allocation5 + $0x48] sm:$0xff]
    %v59 = vld [vmem:[#allocation5 + $0x50] sm:$0xff]
    %v60 = vld [vmem:[#allocation5 + $0x58] sm:$0xff]
    %v61 = vld [vmem:[#allocation5 + $0x60] sm:$0xff]
    %v62 = vld [vmem:[#allocation5 + $0x68] sm:$0xff]
    %v63 = vld [vmem:[#allocation5 + $0x70] sm:$0xff]
    %v64 = vld [vmem:[#allocation5 + $0x78] sm:$0xff]
    %v65 = vld [vmem:[#allocation5 + $0x80] sm:$0xff]
    %v66 = vld [vmem:[#allocation5 + $0x88] sm:$0xff]
    %v67 = vld [vmem:[#allocation5 + $0x90] sm:$0xff]
    %v68 = vld [vmem:[#allocation5 + $0x98] sm:$0xff]
    %v69 = vld [vmem:[#allocation5 + $0xa0] sm:$0xff]
    %v70 = vld [vmem:[#allocation5 + $0xa8] sm:$0xff]
    %v71 = vld [vmem:[#allocation5 + $0xb0] sm:$0xff]
    %v72 = vld [vmem:[#allocation5 + $0xb8] sm:$0xff]
    %v73 = vld [vmem:[#allocation5 + $0xc0] sm:$0xff]
    %v74 = vld [vmem:[#allocation5 + $0xc8] sm:$0xff]
    %v75 = vld [vmem:[#allocation5 + $0xd0] sm:$0xff]
    %v76 = vld [vmem:[#allocation5 + $0xd8] sm:$0xff]
    %v77 = vld [vmem:[#allocation5 + $0xe0] sm:$0xff]
    %v78 = vld [vmem:[#allocation5 + $0xe8] sm:$0xff]
    %v79 = vld [vmem:[#allocation5 + $0xf0] sm:$0xff]
    %v80 = vld [vmem:[#allocation5 + $0xf8] sm:$0xff]
    %v81 = vld [vmem:[#allocation5 + $0x100] sm:$0xff]
    %v82 = vld [vmem:[#allocation5 + $0x108] sm:$0xff]
    %v83 = vld [vmem:[#allocation5 + $0x110] sm:$0xff]
    %v84 = vld [vmem:[#allocation5 + $0x118] sm:$0xff]
    %v85 = vld [vmem:[#allocation5 + $0x120] sm:$0xff]
    %v86 = vld [vmem:[#allocation5 + $0x128] sm:$0xff]
    %v87 = vld [vmem:[#allocation5 + $0x130] sm:$0xff]
    %v88 = vld [vmem:[#allocation5 + $0x138] sm:$0xff]
    %v89 = vld [vmem:[#allocation5 + $0x140] sm:$0xff]
    %v90 = vld [vmem:[#allocation5 + $0x148] sm:$0xff]
    %v91 = vld [vmem:[#allocation5 + $0x150] sm:$0xff]
    %v92 = vld [vmem:[#allocation5 + $0x158] sm:$0xff]
    %v93 = vld [vmem:[#allocation5 + $0x160] sm:$0xff]
    %v94 = vld [vmem:[#allocation5 + $0x168] sm:$0xff]
    %v95 = vld [vmem:[#allocation5 + $0x170] sm:$0xff]
    %v96 = vld [vmem:[#allocation5 + $0x178] sm:$0xff]
    %v97 = vld [vmem:[%s3] sm:$0xf]
    %v99 = vlaneseq
    %v100 = vshrl.u32 %v99, 7
    %v101 = vsub.s32 0, %v100
    %v102 = vrot.slane %v97, %v101
    %v103 = vlaneseq
    %v104 = vshrl.u32 %v103, 7
    %v105 = vsub.s32 1, %v104
    %v106 = vrot.slane %v97, %v105
    %v107 = vlaneseq
    %v108 = vshrl.u32 %v107, 7
    %v109 = vsub.s32 2, %v108
    %v110 = vrot.slane %v97, %v109
    %v111 = vlaneseq
    %v112 = vshrl.u32 %v111, 7
    %v113 = vsub.s32 3, %v112
    %v114 = vrot.slane %v97, %v113
    %v120 = vunpack.c.l.b16 %v48
    %v121 = vunpack.c.h.b16 %v48
    %v122 = vpack.c.b16 %v120, %v120
    %v123 = vpack.c.b16 %v121, %v121
    %v173 = vunpack.c.l.b16 %v49
    %v174 = vunpack.c.h.b16 %v49
    %v175 = vunpack.c.l.b16 %v50
    %v176 = vunpack.c.h.b16 %v50
    %v177 = vunpack.c.l.b16 %v51
    %v178 = vunpack.c.h.b16 %v51
    %v179 = vunpack.c.l.b16 %v52
    %v180 = vunpack.c.h.b16 %v52
    %v181 = vunpack.c.l.b16 %v53
    %v182 = vunpack.c.h.b16 %v53
    %v183 = vunpack.c.l.b16 %v54
    %v184 = vunpack.c.h.b16 %v54
    %v185 = vunpack.c.l.b16 %v55
    %v186 = vunpack.c.h.b16 %v55
    %v187 = vunpack.c.l.b16 %v56
    %v188 = vunpack.c.h.b16 %v56
    %v189 = vunpack.c.l.b16 %v57
    %v190 = vunpack.c.h.b16 %v57
    %v191 = vunpack.c.l.b16 %v58
    %v192 = vunpack.c.h.b16 %v58
    %v193 = vunpack.c.l.b16 %v59
    %v194 = vunpack.c.h.b16 %v59
    %v195 = vunpack.c.l.b16 %v60
    %v196 = vunpack.c.h.b16 %v60
    %v197 = vunpack.c.l.b16 %v61
    %v198 = vunpack.c.h.b16 %v61
    %v199 = vunpack.c.l.b16 %v62
    %v200 = vunpack.c.h.b16 %v62
    %v201 = vunpack.c.l.b16 %v63
    %v202 = vunpack.c.h.b16 %v63
    %v203 = vunpack.c.l.b16 %v64
    %v204 = vunpack.c.h.b16 %v64
    %v205 = vunpack.c.l.b16 %v65
    %v206 = vunpack.c.h.b16 %v65
    %v207 = vunpack.c.l.b16 %v66
    %v208 = vunpack.c.h.b16 %v66
    %v209 = vunpack.c.l.b16 %v67
    %v210 = vunpack.c.h.b16 %v67
    %v211 = vunpack.c.l.b16 %v68
    %v212 = vunpack.c.h.b16 %v68
    %v213 = vunpack.c.l.b16 %v69
    %v214 = vunpack.c.h.b16 %v69
    %v215 = vunpack.c.l.b16 %v70
    %v216 = vunpack.c.h.b16 %v70
    %v217 = vunpack.c.l.b16 %v71
    %v218 = vunpack.c.h.b16 %v71
    %v219 = vunpack.c.l.b16 %v72
    %v220 = vunpack.c.h.b16 %v72
    %v221 = vunpack.c.l.b16 %v73
    %v222 = vunpack.c.h.b16 %v73
    %v223 = vunpack.c.l.b16 %v74
    %v224 = vunpack.c.h.b16 %v74
    %v225 = vunpack.c.l.b16 %v75
    %v226 = vunpack.c.h.b16 %v75
    %v227 = vunpack.c.l.b16 %v76
    %v228 = vunpack.c.h.b16 %v76
    %v229 = vunpack.c.l.b16 %v77
    %v230 = vunpack.c.h.b16 %v77
    %v231 = vunpack.c.l.b16 %v78
    %v232 = vunpack.c.h.b16 %v78
    %v233 = vunpack.c.l.b16 %v79
    %v234 = vunpack.c.h.b16 %v79
    %v235 = vunpack.c.l.b16 %v80
    %v236 = vunpack.c.h.b16 %v80
    %v237 = vunpack.c.l.b16 %v81
    %v238 = vunpack.c.h.b16 %v81
    %v239 = vunpack.c.l.b16 %v82
    %v240 = vunpack.c.h.b16 %v82
    %v241 = vunpack.c.l.b16 %v83
    %v242 = vunpack.c.h.b16 %v83
    %v243 = vunpack.c.l.b16 %v84
    %v244 = vunpack.c.h.b16 %v84
    %v245 = vunpack.c.l.b16 %v85
    %v246 = vunpack.c.h.b16 %v85
    %v247 = vunpack.c.l.b16 %v86
    %v248 = vunpack.c.h.b16 %v86
    %v249 = vunpack.c.l.b16 %v87
    %v250 = vunpack.c.h.b16 %v87
    %v251 = vunpack.c.l.b16 %v88
    %v252 = vunpack.c.h.b16 %v88
    %v253 = vunpack.c.l.b16 %v89
    %v254 = vunpack.c.h.b16 %v89
    %v255 = vunpack.c.l.b16 %v90
    %v256 = vunpack.c.h.b16 %v90
    %v257 = vunpack.c.l.b16 %v91
    %v258 = vunpack.c.h.b16 %v91
    %v259 = vunpack.c.l.b16 %v92
    %v260 = vunpack.c.h.b16 %v92
    %v261 = vunpack.c.l.b16 %v93
    %v262 = vunpack.c.h.b16 %v93
    %v263 = vunpack.c.l.b16 %v94
    %v264 = vunpack.c.h.b16 %v94
    %v265 = vunpack.c.l.b16 %v95
    %v266 = vunpack.c.h.b16 %v95
    %v267 = vunpack.c.l.b16 %v96
    %v268 = vunpack.c.h.b16 %v96
    %v269 = vpack.c.b16 %v177, %v173
    %v270 = vpack.c.b16 %v178, %v174
    %v271 = vpack.c.b16 %v179, %v175
    %v272 = vpack.c.b16 %v180, %v176
    %v273 = vpack.c.b16 %v185, %v181
    %v274 = vpack.c.b16 %v186, %v182
    %v275 = vpack.c.b16 %v187, %v183
    %v276 = vpack.c.b16 %v188, %v184
    %v277 = vpack.c.b16 %v193, %v189
    %v278 = vpack.c.b16 %v194, %v190
    %v279 = vpack.c.b16 %v195, %v191
    %v280 = vpack.c.b16 %v196, %v192
    %v281 = vpack.c.b16 %v201, %v197
    %v282 = vpack.c.b16 %v202, %v198
    %v283 = vpack.c.b16 %v203, %v199
    %v284 = vpack.c.b16 %v204, %v200
    %v285 = vpack.c.b16 %v209, %v205
    %v286 = vpack.c.b16 %v210, %v206
    %v287 = vpack.c.b16 %v211, %v207
    %v288 = vpack.c.b16 %v212, %v208
    %v289 = vpack.c.b16 %v217, %v213
    %v290 = vpack.c.b16 %v218, %v214
    %v291 = vpack.c.b16 %v219, %v215
    %v292 = vpack.c.b16 %v220, %v216
    %v293 = vpack.c.b16 %v225, %v221
    %v294 = vpack.c.b16 %v226, %v222
    %v295 = vpack.c.b16 %v227, %v223
    %v296 = vpack.c.b16 %v228, %v224
    %v297 = vpack.c.b16 %v233, %v229
    %v298 = vpack.c.b16 %v234, %v230
    %v299 = vpack.c.b16 %v235, %v231
    %v300 = vpack.c.b16 %v236, %v232
    %v301 = vpack.c.b16 %v241, %v237
    %v302 = vpack.c.b16 %v242, %v238
    %v303 = vpack.c.b16 %v243, %v239
    %v304 = vpack.c.b16 %v244, %v240
    %v305 = vpack.c.b16 %v249, %v245
    %v306 = vpack.c.b16 %v250, %v246
    %v307 = vpack.c.b16 %v251, %v247
    %v308 = vpack.c.b16 %v252, %v248
    %v309 = vpack.c.b16 %v257, %v253
    %v310 = vpack.c.b16 %v258, %v254
    %v311 = vpack.c.b16 %v259, %v255
    %v312 = vpack.c.b16 %v260, %v256
    %v313 = vpack.c.b16 %v265, %v261
    %v314 = vpack.c.b16 %v266, %v262
    %v315 = vpack.c.b16 %v267, %v263
    %v316 = vpack.c.b16 %v268, %v264
    %vm365 = vcmask 523264
    %v367 = vsel %vm365, %v123, 0
    %369 = vmatprep.subr.bf16.mxu0 %v270
    %370 = vmatpush1.bf16.msra.mxu0 %v269
    %371 = vmatprep.subr.bf16.mxu0 %v274
    %372 = vmatpush1.bf16.msra.mxu0 %v273
    %373 = vmatprep.subr.bf16.mxu0 %v278
    %374 = vmatpush1.bf16.msra.mxu0 %v277
    %375 = vmatprep.subr.bf16.mxu0 %v282
    %376 = vmatpush1.bf16.msra.mxu0 %v281
    %377 = vmatprep.subr.bf16.mxu0 %v286
    %378 = vmatpush1.bf16.msra.mxu0 %v285
    %379 = vmatprep.subr.bf16.mxu0 %v290
    %380 = vmatpush1.bf16.msra.mxu0 %v289
    %381 = vmatprep.subr.bf16.mxu0 %v294
    %382 = vmatpush1.bf16.msra.mxu0 %v293
    %383 = vmatprep.subr.bf16.mxu0 %v298
    %384 = vmatpush1.bf16.msra.mxu0 %v297
    %385 = vmatprep.subr.bf16.mxu0 %v302
    %386 = vmatpush1.bf16.msra.mxu0 %v301
    %387 = vmatprep.subr.bf16.mxu0 %v306
    %388 = vmatpush1.bf16.msra.mxu0 %v305
    %389 = vmatprep.subr.bf16.mxu0 %v310
    %390 = vmatpush1.bf16.msra.mxu0 %v309
    %391 = vmatprep.subr.bf16.mxu0 %v314
    %392 = vmatpush1.bf16.msra.mxu0 %v313
    %393 = vmatprep.subr.bf16.mxu0 0
    %394 = vmatpush1.bf16.msra.mxu0 0
    %395 = vmatprep.subr.bf16.mxu0 0
    %396 = vmatpush1.bf16.msra.mxu0 0
    %397 = vmatprep.subr.bf16.mxu0 0
    %398 = vmatpush1.bf16.msra.mxu0 0
    %399 = vmatprep.subr.bf16.mxu0 0
    %400 = vmatpush1.bf16.msra.mxu0 0
    %401 = vmatprep.mubr.bf16.mxu0 %v367
    %402 = vmatmul.mubr.bf16.gmra.mrb[0].mxu0 %v122
    %v403 = vpop.f32.mrb[0].mxu0
    %v404 = vadd.f32 %v102, %v403
    %v405 = vpop.f32.mrb[0].mxu0
    %v406 = vadd.f32 %v106, %v405
    %v407 = vpop.f32.mrb[0].mxu0
    %v408 = vpop.f32.mrb[0].mxu0
    %409 = vdwg.mxu0
    %410 = vmatprep.subr.bf16.mxu0 %v272
    %411 = vmatpush1.bf16.msra.mxu0 %v271
    %412 = vmatprep.subr.bf16.mxu0 %v276
    %413 = vmatpush1.bf16.msra.mxu0 %v275
    %414 = vmatprep.subr.bf16.mxu0 %v280
    %415 = vmatpush1.bf16.msra.mxu0 %v279
    %416 = vmatprep.subr.bf16.mxu0 %v284
    %417 = vmatpush1.bf16.msra.mxu0 %v283
    %418 = vmatprep.subr.bf16.mxu0 %v288
    %419 = vmatpush1.bf16.msra.mxu0 %v287
    %420 = vmatprep.subr.bf16.mxu0 %v292
    %421 = vmatpush1.bf16.msra.mxu0 %v291
    %422 = vmatprep.subr.bf16.mxu0 %v296
    %423 = vmatpush1.bf16.msra.mxu0 %v295
    %424 = vmatprep.subr.bf16.mxu0 %v300
    %425 = vmatpush1.bf16.msra.mxu0 %v299
    %426 = vmatprep.subr.bf16.mxu0 %v304
    %427 = vmatpush1.bf16.msra.mxu0 %v303
    %428 = vmatprep.subr.bf16.mxu0 %v308
    %429 = vmatpush1.bf16.msra.mxu0 %v307
    %430 = vmatprep.subr.bf16.mxu0 %v312
    %431 = vmatpush1.bf16.msra.mxu0 %v311
    %432 = vmatprep.subr.bf16.mxu0 %v316
    %433 = vmatpush1.bf16.msra.mxu0 %v315
    %434 = vmatprep.subr.bf16.mxu0 0
    %435 = vmatpush1.bf16.msra.mxu0 0
    %436 = vmatprep.subr.bf16.mxu0 0
    %437 = vmatpush1.bf16.msra.mxu0 0
    %438 = vmatprep.subr.bf16.mxu0 0
    %439 = vmatpush1.bf16.msra.mxu0 0
    %440 = vmatprep.subr.bf16.mxu0 0
    %441 = vmatpush1.bf16.msra.mxu0 0
    %442 = vmatprep.mubr.bf16.mxu0 %v367
    %443 = vmatmul.mubr.bf16.gmra.mrb[0].mxu0 %v122
    %v444 = vpop.f32.mrb[0].mxu0
    %v445 = vadd.f32 %v110, %v444
    %v446 = vpop.f32.mrb[0].mxu0
    %v447 = vadd.f32 %v114, %v446
    %v448 = vpop.f32.mrb[0].mxu0
    %v449 = vpop.f32.mrb[0].mxu0
    %450 = vdwg.mxu0
    %v451 = vxor.u32 %v404, 2147483648
    %v452 = vmul.f32 %v451, 1.442695
    %v453 = vpow.pop %v452
    %v454 = vadd.f32 %v453, 1.0
    %v455 = vrcp.pop %v454
    %v456 = vmul.f32 1.0, %v455
    %v457 = vxor.u32 %v406, 2147483648
    %v458 = vmul.f32 %v457, 1.442695
    %v459 = vpow.pop %v458
    %v460 = vadd.f32 %v459, 1.0
    %v461 = vrcp.pop %v460
    %v462 = vmul.f32 1.0, %v461
    %v463 = vtanh.pop %v445
    %v464 = vxor.u32 %v447, 2147483648
    %v465 = vmul.f32 %v464, 1.442695
    %v466 = vpow.pop %v465
    %v467 = vadd.f32 %v466, 1.0
    %v468 = vrcp.pop %v467
    %v469 = vmul.f32 1.0, %v468
    %v470 = vld [vmem:[#allocation2] sm:$0xff]
    %v471 = vmul.f32 %v470, %v462
    %v472 = vmul.f32 %v456, %v463
    %v473 = vadd.f32 %v471, %v472
    %v474 = vtanh.pop %v473
    %v475 = vmul.f32 %v474, %v469
    %476 = vst [vmem:[#allocation7] sm:$0xff] %v475
    %477 = vst [vmem:[#allocation8] sm:$0xff] %v473
    // Predicated region
    $region26: #{tpu_custom_call.1} parent=1 // pred_check
      _
    $region27: #{tpu_custom_call.1} parent=1 // pred_check_branch
      %479 = sbr.rel (0) target = $region29
    $region28: #{tpu_custom_call.1} parent=1 // pred_region
      %s481 = ssub.s32 128, 128
      %482 = vsyncadd [#allocation4], %s481
      %s484 = sshll.u32 [#allocation7], 4
      %s485 = int_to_ptr.vmem [resolvable:$true] %s484
      %487 = dma.vmem_to_hbm [thread:$0]  %s485, 128, %s4, [#allocation4]
    $region29: #{tpu_custom_call.1} parent=1 // pred_fallthru
      _
    // Predicated region
    $region30: #{tpu_custom_call.1} parent=1 // pred_check
      _
    $region31: #{tpu_custom_call.1} parent=1 // pred_check_branch
      %489 = sbr.rel (0) target = $region33
    $region32: #{tpu_custom_call.1} parent=1 // pred_region
      %s491 = ssub.s32 128, 128
      %492 = vsyncadd [#allocation9], %s491
      %s494 = sshll.u32 [#allocation8], 4
      %s495 = int_to_ptr.vmem [resolvable:$true] %s494
      %497 = dma.vmem_to_hbm [thread:$0]  %s495, 128, %s5, [#allocation9]
    $region33: #{tpu_custom_call.1} parent=1 // pred_fallthru
      _
    // Predicated region
    $region34: #{tpu_custom_call.1} parent=1 // pred_check
      _
    $region35: #{tpu_custom_call.1} parent=1 // pred_check_branch
      %499 = sbr.rel (0) target = $region37
    $region36: #{tpu_custom_call.1} parent=1 // pred_region
      %500 = dma.done [#allocation4], 128
    $region37: #{tpu_custom_call.1} parent=1 // pred_fallthru
      _
    // Predicated region
    $region38: #{tpu_custom_call.1} parent=1 // pred_check
      _
    $region39: #{tpu_custom_call.1} parent=1 // pred_check_branch
      %502 = sbr.rel (0) target = $region41
    $region40: #{tpu_custom_call.1} parent=1 // pred_region
      %503 = dma.done [#allocation9], 128
    $region41: #{tpu_custom_call.1} parent=1 // pred_fallthru
      _
    %504 = vsyncpa [#allocation3], 1
    %505 = vsyncpa [#allocation6], 1
    %506 = vsyncpa [#allocation4], 1
    %507 = vsyncpa [#allocation9], 1

</llo_original>
